<compile_context>
chip_gen: v6e
topology: v6e:2x2x1
jax: 0.10.0
libtpu: 0.0.40
codegen_flags: <defaults>
</compile_context>

<pallas_src>
import functools
import math

import jax
import jax.numpy as jnp
from jax import lax
from jax.experimental import pallas as pl
from jax.experimental.pallas import tpu as pltpu


def _t5_rpe_kernel(table_ref, score_ref, out_ref, *,
                   bidirectional, num_buckets, max_distance):
    # table_ref: SMEM (num_buckets,) float32
    # score_ref / out_ref: VMEM (TB, TL, S)
    tl = score_ref.shape[1]
    s = score_ref.shape[2]
    l_tile = pl.program_id(1)

    # relative_position = memory_position - context_position
    ctx = lax.broadcasted_iota(jnp.int32, (tl, s), 0) + l_tile * tl  # query pos
    mem = lax.broadcasted_iota(jnp.int32, (tl, s), 1)                # key pos
    rel = mem - ctx

    nb = num_buckets
    if bidirectional:
        nb = nb // 2
        rb = (rel > 0).astype(jnp.int32) * nb
        rel_pos = jnp.abs(rel)
    else:
        rb = jnp.zeros((tl, s), jnp.int32)
        rel_pos = -jnp.minimum(rel, jnp.zeros_like(rel))

    max_exact = nb // 2
    is_small = rel_pos < max_exact

    # Log-spaced buckets for large distances.  log(0) is guarded; that branch
    # is discarded by the where, matching PyTorch's compute-and-discard.
    safe = jnp.maximum(rel_pos, 1).astype(jnp.float32)
    if_large = max_exact + (
        jnp.log(safe / max_exact)
        / math.log(max_distance / max_exact)
        * (nb - max_exact)
    ).astype(jnp.int32)                      # trunc toward zero == .to(torch.long)
    if_large = jnp.minimum(if_large, nb - 1)

    rb = rb + jnp.where(is_small, rel_pos, if_large)   # (TL, S) in [0, num_buckets)

    # Embedding lookup: unrolled compare/select against the tiny SMEM table.
    bias = jnp.full((tl, s), table_ref[0], jnp.float32)
    for b in range(1, num_buckets):
        bias = jnp.where(rb == b, table_ref[b], bias)

    # Add in fp32 (broadcast over the TB heads), cast once to the output dtype.
    out_ref[...] = (score_ref[...].astype(jnp.float32)
                    + bias[None, :, :]).astype(out_ref.dtype)


def _choose_tiles(bh, seq_len, key_len, itemsize, target_block_bytes):
    """Pick (TB, TL): TB divides bh, TL divides seq_len (multiple of 8 or full),
    and the (TB, TL, key_len) block stays within target_block_bytes."""
    row_bytes = key_len * itemsize
    slab_bytes = seq_len * row_bytes

    # Query tile: full L if it fits a quarter of the budget (leave room for
    # amortizing over heads), otherwise the largest multiple-of-8 divisor.
    tile_budget = max(8 * row_bytes, target_block_bytes // 4)
    if slab_bytes <= tile_budget or seq_len % 8 != 0:
        tl = seq_len
    else:
        cap = max(8, tile_budget // row_bytes)
        tl = 8
        for d in range(8, min(seq_len, cap) + 1, 8):
            if seq_len % d == 0:
                tl = d
    tile_bytes = tl * row_bytes

    # Head block: largest divisor of bh whose block fits the budget.
    tb_cap = max(1, target_block_bytes // max(tile_bytes, 1))
    tb = 1
    for d in range(1, min(bh, tb_cap) + 1):
        if bh % d == 0:
            tb = d
    return tb, tl


def t5_rpe_add_bias(score, table, *, bidirectional=True, num_buckets=32,
                    max_distance=128, target_block_bytes=4 * 1024 * 1024,
                    vmem_limit_bytes=48 * 1024 * 1024):
    """Equivalent of T5RPE.forward(score): returns score + relative position bias."""
    orig_shape = score.shape
    L, S = orig_shape[-2], orig_shape[-1]
    bh = 1
    for d in orig_shape[:-2]:
        bh *= int(d)
    score3 = score.reshape(bh, L, S)
    tbl = table.reshape(num_buckets).astype(jnp.float32)

    itemsize = jnp.dtype(score.dtype).itemsize
    tb, tl = _choose_tiles(bh, L, S, itemsize, target_block_bytes)

    kernel = functools.partial(
        _t5_rpe_kernel,
        bidirectional=bidirectional,
        num_buckets=num_buckets,
        max_distance=max_distance,
    )

    out = pl.pallas_call(
        kernel,
        out_shape=jax.ShapeDtypeStruct((bh, L, S), score.dtype),
        grid_spec=pl.GridSpec(
            grid=(bh // tb, L // tl),
            in_specs=[
                pl.BlockSpec(memory_space=pltpu.MemorySpace.SMEM),   # bias table
                pl.BlockSpec((tb, tl, S), lambda i, j: (i, j, 0)),   # score block
            ],
            out_specs=pl.BlockSpec((tb, tl, S), lambda i, j: (i, j, 0)),
        ),
        compiler_params=pltpu.CompilerParams(
            dimension_semantics=("parallel", "arbitrary"),
            vmem_limit_bytes=vmem_limit_bytes),
    )(tbl, score3)
    return out.reshape(orig_shape)


def _t5_rpe_reference(score, table, *, bidirectional, num_buckets, max_distance):
    """Pure-JAX reference mirroring the PyTorch module."""
    L, S = score.shape[-2], score.shape[-1]
    ctx = jnp.arange(L, dtype=jnp.int32)[:, None]
    mem = jnp.arange(S, dtype=jnp.int32)[None, :]
    rel = mem - ctx
    nb = num_buckets
    rb = jnp.zeros((L, S), jnp.int32)
    if bidirectional:
        nb //= 2
        rb = rb + (rel > 0).astype(jnp.int32) * nb
        rel_pos = jnp.abs(rel)
    else:
        rel_pos = -jnp.minimum(rel, jnp.zeros_like(rel))
    max_exact = nb // 2
    is_small = rel_pos < max_exact
    safe = jnp.maximum(rel_pos, 1).astype(jnp.float32)
    if_large = max_exact + (jnp.log(safe / max_exact)
                            / math.log(max_distance / max_exact)
                            * (nb - max_exact)).astype(jnp.int32)
    if_large = jnp.minimum(if_large, nb - 1)
    rb = rb + jnp.where(is_small, rel_pos, if_large)
    bias = table.reshape(-1)[rb]                      # (L, S)
    return (score.astype(jnp.float32) + bias).astype(score.dtype)


if __name__ == "__main__":
    key = jax.random.PRNGKey(0)
    k_score, k_emb = jax.random.split(key)

    # Small shapes consistent with forward(): score is (B, H, Lq, Lk).
    B, H, L, S = 2, 4, 8, 8
    NUM_BUCKETS, MAX_DIST = 32, 128

    score = jax.random.normal(k_score, (B, H, L, S), dtype=jnp.float32)
    # nn.Embedding(num_buckets, 1) weight, deterministic here.
    rel_attn_bias = jax.random.normal(k_emb, (NUM_BUCKETS, 1), dtype=jnp.float32)

    out = t5_rpe_add_bias(score, rel_attn_bias,
                          bidirectional=True,
                          num_buckets=NUM_BUCKETS,
                          max_distance=MAX_DIST)
    jax.block_until_ready(out)

    ref = _t5_rpe_reference(score, rel_attn_bias,
                            bidirectional=True,
                            num_buckets=NUM_BUCKETS,
                            max_distance=MAX_DIST)
    assert out.shape == score.shape and out.dtype == score.dtype
    assert bool(jnp.allclose(out, ref, atol=1e-5, rtol=1e-5)), "mismatch vs reference"
    print("KERNEL_OK")
</pallas_src>

<mosaic_0001>
module attributes {stable_mosaic.version = 11 : i64} {
  func.func @_t5_rpe_kernel(%arg0: i32, %arg1: i32, %arg2: memref<32xf32, #tpu.memory_space<smem>>, %arg3: memref<8x8x8xf32, #tpu.memory_space<vmem>>, %arg4: memref<8x8x8xf32, #tpu.memory_space<vmem>>) attributes {dimension_semantics = [#tpu.dimension_semantics<parallel>, #tpu.dimension_semantics<arbitrary>], iteration_bounds = array<i64: 1, 1>, scalar_prefetch = 0 : i64, scratch_operands = 0 : i64, tpu.core_type = #tpu.core_type<tc>, window_params = [{transform_indices = @transform_0, window_bounds = array<i64: 32>}, {transform_indices = @transform_1, window_bounds = array<i64: 8, 8, 8>}, {transform_indices = @transform_2, window_bounds = array<i64: 8, 8, 8>}]} {
    %0 = tpu.iota {dimensions = array<i32: 0>} : vector<8x8xi32>
    %c8_i32 = arith.constant 8 : i32
    %1 = arith.muli %arg1, %c8_i32 : i32
    %2 = vector.broadcast %1 : i32 to vector<8x8xi32>
    %3 = arith.addi %0, %2 : vector<8x8xi32>
    %4 = tpu.iota {dimensions = array<i32: 1>} : vector<8x8xi32>
    %5 = arith.subi %4, %3 : vector<8x8xi32>
    %c0_i32 = arith.constant 0 : i32
    %6 = vector.broadcast %c0_i32 : i32 to vector<8x8xi32>
    %7 = arith.cmpi sgt, %5, %6 : vector<8x8xi32>
    %8 = arith.extui %7 : vector<8x8xi1> to vector<8x8xi32>
    %c16_i32 = arith.constant 16 : i32
    %9 = vector.broadcast %c16_i32 : i32 to vector<8x8xi32>
    %10 = arith.muli %8, %9 : vector<8x8xi32>
    %11 = math.absi %5 : vector<8x8xi32>
    %c8_i32_0 = arith.constant 8 : i32
    %12 = vector.broadcast %c8_i32_0 : i32 to vector<8x8xi32>
    %13 = arith.cmpi slt, %11, %12 : vector<8x8xi32>
    %c1_i32 = arith.constant 1 : i32
    %14 = vector.broadcast %c1_i32 : i32 to vector<8x8xi32>
    %15 = arith.maxsi %11, %14 : vector<8x8xi32>
    %16 = arith.sitofp %15 : vector<8x8xi32> to vector<8x8xf32>
    %cst = arith.constant 8.000000e+00 : f32
    %17 = vector.broadcast %cst : f32 to vector<8x8xf32>
    %18 = arith.divf %16, %17 : vector<8x8xf32>
    %19 = math.log %18 : vector<8x8xf32>
    %cst_1 = arith.constant 2.77258873 : f32
    %20 = vector.broadcast %cst_1 : f32 to vector<8x8xf32>
    %21 = arith.divf %19, %20 : vector<8x8xf32>
    %cst_2 = arith.constant 8.000000e+00 : f32
    %22 = vector.broadcast %cst_2 : f32 to vector<8x8xf32>
    %23 = arith.mulf %21, %22 : vector<8x8xf32>
    %24 = arith.fptosi %23 : vector<8x8xf32> to vector<8x8xi32>
    %c8_i32_3 = arith.constant 8 : i32
    %25 = vector.broadcast %c8_i32_3 : i32 to vector<8x8xi32>
    %26 = arith.addi %25, %24 : vector<8x8xi32>
    %c15_i32 = arith.constant 15 : i32
    %27 = vector.broadcast %c15_i32 : i32 to vector<8x8xi32>
    %28 = arith.minsi %26, %27 : vector<8x8xi32>
    %29 = arith.select %13, %11, %28 : vector<8x8xi1>, vector<8x8xi32>
    %30 = arith.addi %10, %29 : vector<8x8xi32>
    %c0 = arith.constant 0 : index
    %31 = memref.load %arg2[%c0] : memref<32xf32, #tpu.memory_space<smem>>
    %32 = vector.broadcast %31 : f32 to vector<8x8xf32>
    %c1_i32_4 = arith.constant 1 : i32
    %33 = vector.broadcast %c1_i32_4 : i32 to vector<8x8xi32>
    %34 = arith.cmpi eq, %30, %33 : vector<8x8xi32>
    %c1 = arith.constant 1 : index
    %35 = memref.load %arg2[%c1] : memref<32xf32, #tpu.memory_space<smem>>
    %36 = vector.broadcast %35 : f32 to vector<8x8xf32>
    %37 = arith.select %34, %36, %32 : vector<8x8xi1>, vector<8x8xf32>
    %c2_i32 = arith.constant 2 : i32
    %38 = vector.broadcast %c2_i32 : i32 to vector<8x8xi32>
    %39 = arith.cmpi eq, %30, %38 : vector<8x8xi32>
    %c2 = arith.constant 2 : index
    %40 = memref.load %arg2[%c2] : memref<32xf32, #tpu.memory_space<smem>>
    %41 = vector.broadcast %40 : f32 to vector<8x8xf32>
    %42 = arith.select %39, %41, %37 : vector<8x8xi1>, vector<8x8xf32>
    %c3_i32 = arith.constant 3 : i32
    %43 = vector.broadcast %c3_i32 : i32 to vector<8x8xi32>
    %44 = arith.cmpi eq, %30, %43 : vector<8x8xi32>
    %c3 = arith.constant 3 : index
    %45 = memref.load %arg2[%c3] : memref<32xf32, #tpu.memory_space<smem>>
    %46 = vector.broadcast %45 : f32 to vector<8x8xf32>
    %47 = arith.select %44, %46, %42 : vector<8x8xi1>, vector<8x8xf32>
    %c4_i32 = arith.constant 4 : i32
    %48 = vector.broadcast %c4_i32 : i32 to vector<8x8xi32>
    %49 = arith.cmpi eq, %30, %48 : vector<8x8xi32>
    %c4 = arith.constant 4 : index
    %50 = memref.load %arg2[%c4] : memref<32xf32, #tpu.memory_space<smem>>
    %51 = vector.broadcast %50 : f32 to vector<8x8xf32>
    %52 = arith.select %49, %51, %47 : vector<8x8xi1>, vector<8x8xf32>
    %c5_i32 = arith.constant 5 : i32
    %53 = vector.broadcast %c5_i32 : i32 to vector<8x8xi32>
    %54 = arith.cmpi eq, %30, %53 : vector<8x8xi32>
    %c5 = arith.constant 5 : index
    %55 = memref.load %arg2[%c5] : memref<32xf32, #tpu.memory_space<smem>>
    %56 = vector.broadcast %55 : f32 to vector<8x8xf32>
    %57 = arith.select %54, %56, %52 : vector<8x8xi1>, vector<8x8xf32>
    %c6_i32 = arith.constant 6 : i32
    %58 = vector.broadcast %c6_i32 : i32 to vector<8x8xi32>
    %59 = arith.cmpi eq, %30, %58 : vector<8x8xi32>
    %c6 = arith.constant 6 : index
    %60 = memref.load %arg2[%c6] : memref<32xf32, #tpu.memory_space<smem>>
    %61 = vector.broadcast %60 : f32 to vector<8x8xf32>
    %62 = arith.select %59, %61, %57 : vector<8x8xi1>, vector<8x8xf32>
    %c7_i32 = arith.constant 7 : i32
    %63 = vector.broadcast %c7_i32 : i32 to vector<8x8xi32>
    %64 = arith.cmpi eq, %30, %63 : vector<8x8xi32>
    %c7 = arith.constant 7 : index
    %65 = memref.load %arg2[%c7] : memref<32xf32, #tpu.memory_space<smem>>
    %66 = vector.broadcast %65 : f32 to vector<8x8xf32>
    %67 = arith.select %64, %66, %62 : vector<8x8xi1>, vector<8x8xf32>
    %c8_i32_5 = arith.constant 8 : i32
    %68 = vector.broadcast %c8_i32_5 : i32 to vector<8x8xi32>
    %69 = arith.cmpi eq, %30, %68 : vector<8x8xi32>
    %c8 = arith.constant 8 : index
    %70 = memref.load %arg2[%c8] : memref<32xf32, #tpu.memory_space<smem>>
    %71 = vector.broadcast %70 : f32 to vector<8x8xf32>
    %72 = arith.select %69, %71, %67 : vector<8x8xi1>, vector<8x8xf32>
    %c9_i32 = arith.constant 9 : i32
    %73 = vector.broadcast %c9_i32 : i32 to vector<8x8xi32>
    %74 = arith.cmpi eq, %30, %73 : vector<8x8xi32>
    %c9 = arith.constant 9 : index
    %75 = memref.load %arg2[%c9] : memref<32xf32, #tpu.memory_space<smem>>
    %76 = vector.broadcast %75 : f32 to vector<8x8xf32>
    %77 = arith.select %74, %76, %72 : vector<8x8xi1>, vector<8x8xf32>
    %c10_i32 = arith.constant 10 : i32
    %78 = vector.broadcast %c10_i32 : i32 to vector<8x8xi32>
    %79 = arith.cmpi eq, %30, %78 : vector<8x8xi32>
    %c10 = arith.constant 10 : index
    %80 = memref.load %arg2[%c10] : memref<32xf32, #tpu.memory_space<smem>>
    %81 = vector.broadcast %80 : f32 to vector<8x8xf32>
    %82 = arith.select %79, %81, %77 : vector<8x8xi1>, vector<8x8xf32>
    %c11_i32 = arith.constant 11 : i32
    %83 = vector.broadcast %c11_i32 : i32 to vector<8x8xi32>
    %84 = arith.cmpi eq, %30, %83 : vector<8x8xi32>
    %c11 = arith.constant 11 : index
    %85 = memref.load %arg2[%c11] : memref<32xf32, #tpu.memory_space<smem>>
    %86 = vector.broadcast %85 : f32 to vector<8x8xf32>
    %87 = arith.select %84, %86, %82 : vector<8x8xi1>, vector<8x8xf32>
    %c12_i32 = arith.constant 12 : i32
    %88 = vector.broadcast %c12_i32 : i32 to vector<8x8xi32>
    %89 = arith.cmpi eq, %30, %88 : vector<8x8xi32>
    %c12 = arith.constant 12 : index
    %90 = memref.load %arg2[%c12] : memref<32xf32, #tpu.memory_space<smem>>
    %91 = vector.broadcast %90 : f32 to vector<8x8xf32>
    %92 = arith.select %89, %91, %87 : vector<8x8xi1>, vector<8x8xf32>
    %c13_i32 = arith.constant 13 : i32
    %93 = vector.broadcast %c13_i32 : i32 to vector<8x8xi32>
    %94 = arith.cmpi eq, %30, %93 : vector<8x8xi32>
    %c13 = arith.constant 13 : index
    %95 = memref.load %arg2[%c13] : memref<32xf32, #tpu.memory_space<smem>>
    %96 = vector.broadcast %95 : f32 to vector<8x8xf32>
    %97 = arith.select %94, %96, %92 : vector<8x8xi1>, vector<8x8xf32>
    %c14_i32 = arith.constant 14 : i32
    %98 = vector.broadcast %c14_i32 : i32 to vector<8x8xi32>
    %99 = arith.cmpi eq, %30, %98 : vector<8x8xi32>
    %c14 = arith.constant 14 : index
    %100 = memref.load %arg2[%c14] : memref<32xf32, #tpu.memory_space<smem>>
    %101 = vector.broadcast %100 : f32 to vector<8x8xf32>
    %102 = arith.select %99, %101, %97 : vector<8x8xi1>, vector<8x8xf32>
    %c15_i32_6 = arith.constant 15 : i32
    %103 = vector.broadcast %c15_i32_6 : i32 to vector<8x8xi32>
    %104 = arith.cmpi eq, %30, %103 : vector<8x8xi32>
    %c15 = arith.constant 15 : index
    %105 = memref.load %arg2[%c15] : memref<32xf32, #tpu.memory_space<smem>>
    %106 = vector.broadcast %105 : f32 to vector<8x8xf32>
    %107 = arith.select %104, %106, %102 : vector<8x8xi1>, vector<8x8xf32>
    %c16_i32_7 = arith.constant 16 : i32
    %108 = vector.broadcast %c16_i32_7 : i32 to vector<8x8xi32>
    %109 = arith.cmpi eq, %30, %108 : vector<8x8xi32>
    %c16 = arith.constant 16 : index
    %110 = memref.load %arg2[%c16] : memref<32xf32, #tpu.memory_space<smem>>
    %111 = vector.broadcast %110 : f32 to vector<8x8xf32>
    %112 = arith.select %109, %111, %107 : vector<8x8xi1>, vector<8x8xf32>
    %c17_i32 = arith.constant 17 : i32
    %113 = vector.broadcast %c17_i32 : i32 to vector<8x8xi32>
    %114 = arith.cmpi eq, %30, %113 : vector<8x8xi32>
    %c17 = arith.constant 17 : index
    %115 = memref.load %arg2[%c17] : memref<32xf32, #tpu.memory_space<smem>>
    %116 = vector.broadcast %115 : f32 to vector<8x8xf32>
    %117 = arith.select %114, %116, %112 : vector<8x8xi1>, vector<8x8xf32>
    %c18_i32 = arith.constant 18 : i32
    %118 = vector.broadcast %c18_i32 : i32 to vector<8x8xi32>
    %119 = arith.cmpi eq, %30, %118 : vector<8x8xi32>
    %c18 = arith.constant 18 : index
    %120 = memref.load %arg2[%c18] : memref<32xf32, #tpu.memory_space<smem>>
    %121 = vector.broadcast %120 : f32 to vector<8x8xf32>
    %122 = arith.select %119, %121, %117 : vector<8x8xi1>, vector<8x8xf32>
    %c19_i32 = arith.constant 19 : i32
    %123 = vector.broadcast %c19_i32 : i32 to vector<8x8xi32>
    %124 = arith.cmpi eq, %30, %123 : vector<8x8xi32>
    %c19 = arith.constant 19 : index
    %125 = memref.load %arg2[%c19] : memref<32xf32, #tpu.memory_space<smem>>
    %126 = vector.broadcast %125 : f32 to vector<8x8xf32>
    %127 = arith.select %124, %126, %122 : vector<8x8xi1>, vector<8x8xf32>
    %c20_i32 = arith.constant 20 : i32
    %128 = vector.broadcast %c20_i32 : i32 to vector<8x8xi32>
    %129 = arith.cmpi eq, %30, %128 : vector<8x8xi32>
    %c20 = arith.constant 20 : index
    %130 = memref.load %arg2[%c20] : memref<32xf32, #tpu.memory_space<smem>>
    %131 = vector.broadcast %130 : f32 to vector<8x8xf32>
    %132 = arith.select %129, %131, %127 : vector<8x8xi1>, vector<8x8xf32>
    %c21_i32 = arith.constant 21 : i32
    %133 = vector.broadcast %c21_i32 : i32 to vector<8x8xi32>
    %134 = arith.cmpi eq, %30, %133 : vector<8x8xi32>
    %c21 = arith.constant 21 : index
    %135 = memref.load %arg2[%c21] : memref<32xf32, #tpu.memory_space<smem>>
    %136 = vector.broadcast %135 : f32 to vector<8x8xf32>
    %137 = arith.select %134, %136, %132 : vector<8x8xi1>, vector<8x8xf32>
    %c22_i32 = arith.constant 22 : i32
    %138 = vector.broadcast %c22_i32 : i32 to vector<8x8xi32>
    %139 = arith.cmpi eq, %30, %138 : vector<8x8xi32>
    %c22 = arith.constant 22 : index
    %140 = memref.load %arg2[%c22] : memref<32xf32, #tpu.memory_space<smem>>
    %141 = vector.broadcast %140 : f32 to vector<8x8xf32>
    %142 = arith.select %139, %141, %137 : vector<8x8xi1>, vector<8x8xf32>
    %c23_i32 = arith.constant 23 : i32
    %143 = vector.broadcast %c23_i32 : i32 to vector<8x8xi32>
    %144 = arith.cmpi eq, %30, %143 : vector<8x8xi32>
    %c23 = arith.constant 23 : index
    %145 = memref.load %arg2[%c23] : memref<32xf32, #tpu.memory_space<smem>>
    %146 = vector.broadcast %145 : f32 to vector<8x8xf32>
    %147 = arith.select %144, %146, %142 : vector<8x8xi1>, vector<8x8xf32>
    %c24_i32 = arith.constant 24 : i32
    %148 = vector.broadcast %c24_i32 : i32 to vector<8x8xi32>
    %149 = arith.cmpi eq, %30, %148 : vector<8x8xi32>
    %c24 = arith.constant 24 : index
    %150 = memref.load %arg2[%c24] : memref<32xf32, #tpu.memory_space<smem>>
    %151 = vector.broadcast %150 : f32 to vector<8x8xf32>
    %152 = arith.select %149, %151, %147 : vector<8x8xi1>, vector<8x8xf32>
    %c25_i32 = arith.constant 25 : i32
    %153 = vector.broadcast %c25_i32 : i32 to vector<8x8xi32>
    %154 = arith.cmpi eq, %30, %153 : vector<8x8xi32>
    %c25 = arith.constant 25 : index
    %155 = memref.load %arg2[%c25] : memref<32xf32, #tpu.memory_space<smem>>
    %156 = vector.broadcast %155 : f32 to vector<8x8xf32>
    %157 = arith.select %154, %156, %152 : vector<8x8xi1>, vector<8x8xf32>
    %c26_i32 = arith.constant 26 : i32
    %158 = vector.broadcast %c26_i32 : i32 to vector<8x8xi32>
    %159 = arith.cmpi eq, %30, %158 : vector<8x8xi32>
    %c26 = arith.constant 26 : index
    %160 = memref.load %arg2[%c26] : memref<32xf32, #tpu.memory_space<smem>>
    %161 = vector.broadcast %160 : f32 to vector<8x8xf32>
    %162 = arith.select %159, %161, %157 : vector<8x8xi1>, vector<8x8xf32>
    %c27_i32 = arith.constant 27 : i32
    %163 = vector.broadcast %c27_i32 : i32 to vector<8x8xi32>
    %164 = arith.cmpi eq, %30, %163 : vector<8x8xi32>
    %c27 = arith.constant 27 : index
    %165 = memref.load %arg2[%c27] : memref<32xf32, #tpu.memory_space<smem>>
    %166 = vector.broadcast %165 : f32 to vector<8x8xf32>
    %167 = arith.select %164, %166, %162 : vector<8x8xi1>, vector<8x8xf32>
    %c28_i32 = arith.constant 28 : i32
    %168 = vector.broadcast %c28_i32 : i32 to vector<8x8xi32>
    %169 = arith.cmpi eq, %30, %168 : vector<8x8xi32>
    %c28 = arith.constant 28 : index
    %170 = memref.load %arg2[%c28] : memref<32xf32, #tpu.memory_space<smem>>
    %171 = vector.broadcast %170 : f32 to vector<8x8xf32>
    %172 = arith.select %169, %171, %167 : vector<8x8xi1>, vector<8x8xf32>
    %c29_i32 = arith.constant 29 : i32
    %173 = vector.broadcast %c29_i32 : i32 to vector<8x8xi32>
    %174 = arith.cmpi eq, %30, %173 : vector<8x8xi32>
    %c29 = arith.constant 29 : index
    %175 = memref.load %arg2[%c29] : memref<32xf32, #tpu.memory_space<smem>>
    %176 = vector.broadcast %175 : f32 to vector<8x8xf32>
    %177 = arith.select %174, %176, %172 : vector<8x8xi1>, vector<8x8xf32>
    %c30_i32 = arith.constant 30 : i32
    %178 = vector.broadcast %c30_i32 : i32 to vector<8x8xi32>
    %179 = arith.cmpi eq, %30, %178 : vector<8x8xi32>
    %c30 = arith.constant 30 : index
    %180 = memref.load %arg2[%c30] : memref<32xf32, #tpu.memory_space<smem>>
    %181 = vector.broadcast %180 : f32 to vector<8x8xf32>
    %182 = arith.select %179, %181, %177 : vector<8x8xi1>, vector<8x8xf32>
    %c31_i32 = arith.constant 31 : i32
    %183 = vector.broadcast %c31_i32 : i32 to vector<8x8xi32>
    %184 = arith.cmpi eq, %30, %183 : vector<8x8xi32>
    %c31 = arith.constant 31 : index
    %185 = memref.load %arg2[%c31] : memref<32xf32, #tpu.memory_space<smem>>
    %186 = vector.broadcast %185 : f32 to vector<8x8xf32>
    %187 = arith.select %184, %186, %182 : vector<8x8xi1>, vector<8x8xf32>
    %c0_8 = arith.constant 0 : index
    %c0_9 = arith.constant 0 : index
    %c0_10 = arith.constant 0 : index
    %188 = vector.load %arg3[%c0_8, %c0_9, %c0_10] : memref<8x8x8xf32, #tpu.memory_space<vmem>>, vector<8x8x8xf32>
    %189 = vector.shape_cast %187 : vector<8x8xf32> to vector<1x8x8xf32>
    %190 = vector.broadcast %189 : vector<1x8x8xf32> to vector<8x8x8xf32>
    %191 = arith.addf %188, %190 : vector<8x8x8xf32>
    %c0_11 = arith.constant 0 : index
    %c0_12 = arith.constant 0 : index
    %c0_13 = arith.constant 0 : index
    %192 = vector.load %arg4[%c0_11, %c0_12, %c0_13] : memref<8x8x8xf32, #tpu.memory_space<vmem>>, vector<8x8x8xf32>
    tpu.vector_store %arg4[%c0_11, %c0_12, %c0_13], %191 {strides = array<i32>} : memref<8x8x8xf32, #tpu.memory_space<vmem>>, vector<8x8x8xf32>,
    return
  }
  func.func @transform_0(%arg0: i32, %arg1: i32) -> i32 {
    %c0_i32 = arith.constant 0 : i32
    %c0_i32_0 = arith.constant 0 : i32
    return %c0_i32 : i32
  }
  func.func @transform_1(%arg0: i32, %arg1: i32) -> (i32, i32, i32) {
    %c0_i32 = arith.constant 0 : i32
    %c0_i32_0 = arith.constant 0 : i32
    return %arg0, %arg1, %c0_i32 : i32, i32, i32
  }
  func.func @transform_2(%arg0: i32, %arg1: i32) -> (i32, i32, i32) {
    %c0_i32 = arith.constant 0 : i32
    %c0_i32_0 = arith.constant 0 : i32
    return %arg0, %arg1, %c0_i32 : i32, i32, i32
  }
}

</mosaic_0001>

<llo_original>
// kernel: tpu_custom_call.1
$region0: #{tpu_custom_call.1}
  #allocation0 [shape = 'u32[]', space=smem, size = 0x4, offset = 0x4, fixed_abs, tag = 'smem constant byte address 0x4 - core index']
  #allocation1 [shape = 'u32[144,128]{1,0:T(1,128)}', space=vmem, size = 0x12000, scoped, tag = 'internal scratch']
  %s0 = inlined_call_operand.hbm [shape: f32[32], index: 0, kind: input, shape index: {}]
  %s1 = inlined_call_operand.hbm [shape: f32[8,8,8], index: 1, kind: input, shape index: {}]
  %s2 = inlined_call_operand.hbm [shape: f32[8,8,8], index: 2, kind: output, shape index: {}]
  %s3 = sld [smem:[#allocation0]]
  $region26: #{tpu_custom_call.1} parent=0
    _
  %s5 = ssub.s32 1, %s3
  %s6 = scalar_select 0, %s5, %s3
  $region1: #{tpu_custom_call.1} parent=0
    #allocation2 [shape = 'u8[512]{0}', space=smem, size = 0x200, scoped, tag = 'input window, operand 0, single buffered']
    #allocation3 [shape = 's32[1]{0}', space=sflag, size = 0x4, scoped, tag = 'scoped memory for tpu_custom_call.1']
    #allocation4 [shape = 's32[1]{0}', space=sflag, size = 0x4, scoped, tag = 'scoped memory for tpu_custom_call.1']
    #allocation5 [shape = 's32[1]{0}', space=sflag, size = 0x4, scoped, tag = 'scoped memory for tpu_custom_call.1']
    #allocation6 [shape = 'u8[32768]{0}', space=vmem, size = 0x8000, scoped, tag = 'input window, operand 1, single buffered']
    #allocation7 [shape = 'u8[32768]{0}', space=vmem, size = 0x8000, scoped, tag = 'output window, operand 0, single buffered']
    %7 = vsyncpa [#allocation5], 0
    %8 = vsyncpa [#allocation3], 0
    %9 = vsyncpa [#allocation4], 0
    // Predicated region
    $region2: #{tpu_custom_call.1} parent=1 // pred_check
      _
    $region3: #{tpu_custom_call.1} parent=1 // pred_check_branch
      %11 = sbr.rel (0) target = $region5
    $region4: #{tpu_custom_call.1} parent=1 // pred_region
      %s13 = ssub.s32 16, 16
      %14 = vsyncadd [#allocation5], %s13
      %17 = dma.hbm_to_smem %s0, 16, [#allocation2], [#allocation5]
    $region5: #{tpu_custom_call.1} parent=1 // pred_fallthru
      _
    // Predicated region
    $region6: #{tpu_custom_call.1} parent=1 // pred_check
      _
    $region7: #{tpu_custom_call.1} parent=1 // pred_check_branch
      %19 = sbr.rel (0) target = $region9
    $region8: #{tpu_custom_call.1} parent=1 // pred_region
      %s21 = ssub.s32 1024, 1024
      %22 = vsyncadd [#allocation3], %s21
      %s23 = sshll.u32 [#allocation6], 4
      %s24 = int_to_ptr.vmem [resolvable:$true] %s23
      %29 = dma.hbm_to_vmem [thread:$0]  %s1, 1024, %s24, [#allocation3], 128, 128, 8
    $region9: #{tpu_custom_call.1} parent=1 // pred_fallthru
      _
    // Predicated region
    $region10: #{tpu_custom_call.1} parent=1 // pred_check
      _
    $region11: #{tpu_custom_call.1} parent=1 // pred_check_branch
      %31 = sbr.rel (0) target = $region13
    $region12: #{tpu_custom_call.1} parent=1 // pred_region
      %32 = dma.done [#allocation5], 16
    $region13: #{tpu_custom_call.1} parent=1 // pred_fallthru
      _
    // Predicated region
    $region14: #{tpu_custom_call.1} parent=1 // pred_check
      _
    $region15: #{tpu_custom_call.1} parent=1 // pred_check_branch
      %34 = sbr.rel (0) target = $region17
    $region16: #{tpu_custom_call.1} parent=1 // pred_region
      %35 = dma.done [#allocation3], 1024
    $region17: #{tpu_custom_call.1} parent=1 // pred_fallthru
      _
    %36 = sfence
    %v37 = vlaneseq
    %v38 = vshrl.u32 %v37, 7
    %s39 = smul.u32 0, 8
    %v40 = vstv %s39
    %v41 = vadd.s32 %v38, %v40
    %v42 = vlaneseq
    %v43 = vand.u32 %v42, 127
    %v44 = vsub.s32 %v43, %v41
    %vm45 = vcmp.gt.s32.totalorder %v44, 0
    %v46 = vsel %vm45, 1, 0
    %v47 = vmul.u32 %v46, 16
    %vm48 = vcmp.lt.s32.totalorder %v44, 0
    %v49 = vsub.s32 0, %v44
    %v50 = vsel %vm48, %v49, %v44
    %vm51 = vcmp.lt.s32.totalorder %v50, 8
    %vm52 = vcmp.gt.s32.totalorder %v50, 1
    %v53 = vsel %vm52, %v50, 1
    %v54 = vcvt.s32.f32 %v53
    %v55 = vrcp.pop 8.0
    %v56 = vmul.f32 %v54, %v55
    %v57 = vlog2.pop %v56
    %v58 = vmul.f32 %v57, 0.6931472
    %v59 = vrcp.pop 2.7725887
    %v60 = vmul.f32 %v58, %v59
    %v61 = vmul.f32 %v60, 8.0
    %v62 = vcvt.f32.s32.to.zero.pseudo %v61
    %v63 = vadd.s32 %v62, 8
    %vm64 = vcmp.lt.s32.totalorder %v63, 15
    %v65 = vsel %vm64, %v63, 15
    %v66 = vsel %vm51, %v50, %v65
    %v67 = vadd.s32 %v47, %v66
    %s68 = sld [smem:[#allocation2]]
    %v69 = vstv %s68
    %vm70 = vcmp.eq.s32.totalorder %v67, 1
    %s71 = sld [smem:[#allocation2 + $0x1]]
    %v72 = vstv %s71
    %v73 = vsel %vm70, %v72, %v69
    %vm74 = vcmp.eq.s32.totalorder %v67, 2
    %s75 = sld [smem:[#allocation2 + $0x2]]
    %v76 = vstv %s75
    %v77 = vsel %vm74, %v76, %v73
    %vm78 = vcmp.eq.s32.totalorder %v67, 3
    %s79 = sld [smem:[#allocation2 + $0x3]]
    %v80 = vstv %s79
    %v81 = vsel %vm78, %v80, %v77
    %vm82 = vcmp.eq.s32.totalorder %v67, 4
    %s83 = sld [smem:[#allocation2 + $0x4]]
    %v84 = vstv %s83
    %v85 = vsel %vm82, %v84, %v81
    %vm86 = vcmp.eq.s32.totalorder %v67, 5
    %s87 = sld [smem:[#allocation2 + $0x5]]
    %v88 = vstv %s87
    %v89 = vsel %vm86, %v88, %v85
    %vm90 = vcmp.eq.s32.totalorder %v67, 6
    %s91 = sld [smem:[#allocation2 + $0x6]]
    %v92 = vstv %s91
    %v93 = vsel %vm90, %v92, %v89
    %vm94 = vcmp.eq.s32.totalorder %v67, 7
    %s95 = sld [smem:[#allocation2 + $0x7]]
    %v96 = vstv %s95
    %v97 = vsel %vm94, %v96, %v93
    %vm98 = vcmp.eq.s32.totalorder %v67, 8
    %s99 = sld [smem:[#allocation2 + $0x8]]
    %v100 = vstv %s99
    %v101 = vsel %vm98, %v100, %v97
    %vm102 = vcmp.eq.s32.totalorder %v67, 9
    %s103 = sld [smem:[#allocation2 + $0x9]]
    %v104 = vstv %s103
    %v105 = vsel %vm102, %v104, %v101
    %vm106 = vcmp.eq.s32.totalorder %v67, 10
    %s107 = sld [smem:[#allocation2 + $0xa]]
    %v108 = vstv %s107
    %v109 = vsel %vm106, %v108, %v105
    %vm110 = vcmp.eq.s32.totalorder %v67, 11
    %s111 = sld [smem:[#allocation2 + $0xb]]
    %v112 = vstv %s111
    %v113 = vsel %vm110, %v112, %v109
    %vm114 = vcmp.eq.s32.totalorder %v67, 12
    %s115 = sld [smem:[#allocation2 + $0xc]]
    %v116 = vstv %s115
    %v117 = vsel %vm114, %v116, %v113
    %vm118 = vcmp.eq.s32.totalorder %v67, 13
    %s119 = sld [smem:[#allocation2 + $0xd]]
    %v120 = vstv %s119
    %v121 = vsel %vm118, %v120, %v117
    %vm122 = vcmp.eq.s32.totalorder %v67, 14
    %s123 = sld [smem:[#allocation2 + $0xe]]
    %v124 = vstv %s123
    %v125 = vsel %vm122, %v124, %v121
    %vm126 = vcmp.eq.s32.totalorder %v67, 15
    %s127 = sld [smem:[#allocation2 + $0xf]]
    %v128 = vstv %s127
    %v129 = vsel %vm126, %v128, %v125
    %vm130 = vcmp.eq.s32.totalorder %v67, 16
    %s131 = sld [smem:[#allocation2 + $0x10]]
    %v132 = vstv %s131
    %v133 = vsel %vm130, %v132, %v129
    %vm134 = vcmp.eq.s32.totalorder %v67, 17
    %s135 = sld [smem:[#allocation2 + $0x11]]
    %v136 = vstv %s135
    %v137 = vsel %vm134, %v136, %v133
    %vm138 = vcmp.eq.s32.totalorder %v67, 18
    %s139 = sld [smem:[#allocation2 + $0x12]]
    %v140 = vstv %s139
    %v141 = vsel %vm138, %v140, %v137
    %vm142 = vcmp.eq.s32.totalorder %v67, 19
    %s143 = sld [smem:[#allocation2 + $0x13]]
    %v144 = vstv %s143
    %v145 = vsel %vm142, %v144, %v141
    %vm146 = vcmp.eq.s32.totalorder %v67, 20
    %s147 = sld [smem:[#allocation2 + $0x14]]
    %v148 = vstv %s147
    %v149 = vsel %vm146, %v148, %v145
    %vm150 = vcmp.eq.s32.totalorder %v67, 21
    %s151 = sld [smem:[#allocation2 + $0x15]]
    %v152 = vstv %s151
    %v153 = vsel %vm150, %v152, %v149
    %vm154 = vcmp.eq.s32.totalorder %v67, 22
    %s155 = sld [smem:[#allocation2 + $0x16]]
    %v156 = vstv %s155
    %v157 = vsel %vm154, %v156, %v153
    %vm158 = vcmp.eq.s32.totalorder %v67, 23
    %s159 = sld [smem:[#allocation2 + $0x17]]
    %v160 = vstv %s159
    %v161 = vsel %vm158, %v160, %v157
    %vm162 = vcmp.eq.s32.totalorder %v67, 24
    %s163 = sld [smem:[#allocation2 + $0x18]]
    %v164 = vstv %s163
    %v165 = vsel %vm162, %v164, %v161
    %vm166 = vcmp.eq.s32.totalorder %v67, 25
    %s167 = sld [smem:[#allocation2 + $0x19]]
    %v168 = vstv %s167
    %v169 = vsel %vm166, %v168, %v165
    %vm170 = vcmp.eq.s32.totalorder %v67, 26
    %s171 = sld [smem:[#allocation2 + $0x1a]]
    %v172 = vstv %s171
    %v173 = vsel %vm170, %v172, %v169
    %vm174 = vcmp.eq.s32.totalorder %v67, 27
    %s175 = sld [smem:[#allocation2 + $0x1b]]
    %v176 = vstv %s175
    %v177 = vsel %vm174, %v176, %v173
    %vm178 = vcmp.eq.s32.totalorder %v67, 28
    %s179 = sld [smem:[#allocation2 + $0x1c]]
    %v180 = vstv %s179
    %v181 = vsel %vm178, %v180, %v177
    %vm182 = vcmp.eq.s32.totalorder %v67, 29
    %s183 = sld [smem:[#allocation2 + $0x1d]]
    %v184 = vstv %s183
    %v185 = vsel %vm182, %v184, %v181
    %vm186 = vcmp.eq.s32.totalorder %v67, 30
    %s187 = sld [smem:[#allocation2 + $0x1e]]
    %v188 = vstv %s187
    %v189 = vsel %vm186, %v188, %v185
    %vm190 = vcmp.eq.s32.totalorder %v67, 31
    %s191 = sld [smem:[#allocation2 + $0x1f]]
    %v192 = vstv %s191
    %v193 = vsel %vm190, %v192, %v189
    %v194 = vld [vmem:[#allocation6] sm:$0xff]
    %v195 = vld [vmem:[#allocation6 + $0x8] sm:$0xff]
    %v196 = vld [vmem:[#allocation6 + $0x10] sm:$0xff]
    %v197 = vld [vmem:[#allocation6 + $0x18] sm:$0xff]
    %v198 = vld [vmem:[#allocation6 + $0x20] sm:$0xff]
    %v199 = vld [vmem:[#allocation6 + $0x28] sm:$0xff]
    %v200 = vld [vmem:[#allocation6 + $0x30] sm:$0xff]
    %v201 = vld [vmem:[#allocation6 + $0x38] sm:$0xff]
    %v202 = vadd.f32 %v194, %v193
    %v203 = vadd.f32 %v195, %v193
    %v204 = vadd.f32 %v196, %v193
    %v205 = vadd.f32 %v197, %v193
    %v206 = vadd.f32 %v198, %v193
    %v207 = vadd.f32 %v199, %v193
    %v208 = vadd.f32 %v200, %v193
    %v209 = vadd.f32 %v201, %v193
    %vm210 = vcmask 64512
    %211 = vst.msk [vmem:[#allocation7] sm:$0xff] %vm210, %v202
    %212 = vst.msk [vmem:[#allocation7 + $0x8] sm:$0xff] %vm210, %v203
    %213 = vst.msk [vmem:[#allocation7 + $0x10] sm:$0xff] %vm210, %v204
    %214 = vst.msk [vmem:[#allocation7 + $0x18] sm:$0xff] %vm210, %v205
    %215 = vst.msk [vmem:[#allocation7 + $0x20] sm:$0xff] %vm210, %v206
    %216 = vst.msk [vmem:[#allocation7 + $0x28] sm:$0xff] %vm210, %v207
    %217 = vst.msk [vmem:[#allocation7 + $0x30] sm:$0xff] %vm210, %v208
    %218 = vst.msk [vmem:[#allocation7 + $0x38] sm:$0xff] %vm210, %v209
    // Predicated region
    $region18: #{tpu_custom_call.1} parent=1 // pred_check
      _
    $region19: #{tpu_custom_call.1} parent=1 // pred_check_branch
      %220 = sbr.rel (0) target = $region21
    $region20: #{tpu_custom_call.1} parent=1 // pred_region
      %s222 = ssub.s32 1024, 1024
      %223 = vsyncadd [#allocation4], %s222
      %s224 = sshll.u32 [#allocation7], 4
      %s225 = int_to_ptr.vmem [resolvable:$true] %s224
      %230 = dma.vmem_to_hbm [thread:$0]  %s225, 1024, %s2, [#allocation4], 128, 128, 8
    $region21: #{tpu_custom_call.1} parent=1 // pred_fallthru
      _
    // Predicated region
    $region22: #{tpu_custom_call.1} parent=1 // pred_check
      _
    $region23: #{tpu_custom_call.1} parent=1 // pred_check_branch
      %232 = sbr.rel (0) target = $region25
    $region24: #{tpu_custom_call.1} parent=1 // pred_region
      %233 = dma.done [#allocation4], 1024
    $region25: #{tpu_custom_call.1} parent=1 // pred_fallthru
      _
    %234 = vsyncpa [#allocation3], 1
    %235 = vsyncpa [#allocation4], 1
    %236 = vsyncpa [#allocation5], 1

</llo_original>
